<compile_context>
chip_gen: v7x
topology: tpu7x:2x2x1
jax: 0.10.0
libtpu: 0.0.40
codegen_flags: <defaults>
</compile_context>

<pallas_src>
import numpy as np
import jax
import jax.numpy as jnp
from jax.experimental import pallas as pl
from jax.experimental.pallas import tpu as pltpu

POOL_SIZES = (1, 2, 3, 6)
BN_EPS = 1e-5
LANE = 128
SUBLANE = 8
NEG_BIG = -1e30


def _round_up(v, m):
    return (v + m - 1) // m * m


# ---------------------------------------------------------------------------
# tiny constant matrices: adaptive-avg-pool and bilinear (align_corners=True)
# ---------------------------------------------------------------------------
def adaptive_pool_matrix(in_size, out_size):
    """Row-stochastic matrix implementing torch AdaptiveAvgPool semantics (1D)."""
    P = np.zeros((out_size, in_size), np.float32)
    for i in range(out_size):
        start = (i * in_size) // out_size
        end = -((-(i + 1) * in_size) // out_size)   # ceil((i+1)*in/out)
        P[i, start:end] = 1.0 / (end - start)
    return P


def bilinear_matrix(out_size, in_size):
    """F.interpolate(mode='bilinear', align_corners=True) along one axis."""
    U = np.zeros((out_size, in_size), np.float32)
    if in_size == 1:
        U[:, 0] = 1.0
        return U
    scale = (in_size - 1) / (out_size - 1)
    for y in range(out_size):
        src = y * scale
        i0 = min(int(np.floor(src)), in_size - 1)
        i1 = min(i0 + 1, in_size - 1)
        frac = src - i0
        U[y, i0] += 1.0 - frac
        U[y, i1] += frac
    return U


def build_branch_mats(H, W):
    pool_mats, up_mats = [], []
    for s in POOL_SIZES:
        pool_mats.append(np.kron(adaptive_pool_matrix(H, s), adaptive_pool_matrix(W, s)))
        up_mats.append(np.kron(bilinear_matrix(H, s), bilinear_matrix(W, s)))
    return pool_mats, up_mats


def build_stacked_mats_T(H, W):
    """Transposed stacked constants for the channels-first layout.

    A_T (HW, S_pad):  x_chw_tile (C,hw) @ A_T_tile (hw,S) -> pooled^T (C,S)
    B_T (S_pad, HW):  Y^T (OC,S) @ B_T_tile (S,hw)       -> upsampled feats^T
    Branch b occupies S-columns/rows [off_b : off_b + s_b^2]; S padded to 128.
    """
    HW = H * W
    pool_mats, up_mats = build_branch_mats(H, W)
    offsets, off = [], 0
    for s in POOL_SIZES:
        offsets.append(off)
        off = _round_up(off + s * s, SUBLANE)
    S_pad = _round_up(off, LANE)                       # review: pad S to 128 lanes
    A_T = np.zeros((HW, S_pad), np.float32)
    B_T = np.zeros((S_pad, HW), np.float32)
    for s, o, P, U in zip(POOL_SIZES, offsets, pool_mats, up_mats):
        A_T[:, o:o + s * s] = P.T                      # P: (s*s, HW)
        B_T[o:o + s * s, :] = U.T                      # U: (HW, s*s)
    return A_T, B_T, tuple(offsets), S_pad


# ---------------------------------------------------------------------------
# VMEM budget helpers (device-aware, no double-counting of invariant blocks)
# ---------------------------------------------------------------------------
def _block_bytes(shape, dtype):
    s = list(shape)
    s[-1] = _round_up(s[-1], LANE)
    if len(s) >= 2:
        s[-2] = _round_up(s[-2], SUBLANE)
    return int(np.prod(s)) * np.dtype(dtype).itemsize


def _device_vmem_budget():
    try:
        cap = int(pltpu.get_tpu_info().vmem_capacity_bytes)
    except Exception:
        cap = 64 << 20            # conservative floor: v7x per-TensorCore VMEM
    return max(cap - (16 << 20), 16 << 20)   # leave headroom for compiler scratch


def _vmem_limit(usage, budget):
    return int(min(budget, max(2 * usage, 16 << 20)))


def _pass1_vmem(t, C, S_pad):
    return (2 * _block_bytes((1, C, t), jnp.bfloat16)        # x tile (varies)
            + 2 * _block_bytes((t, S_pad), jnp.bfloat16)     # A^T tile (varies)
            + 2 * _block_bytes((1, 1, C, S_pad), jnp.float32))  # pooled accumulator


def _pass2_vmem(t, C, S_pad, OC8, out_dtype):
    return (2 * _block_bytes((1, C, t), jnp.bfloat16)        # x tile (varies)
            + 2 * _block_bytes((S_pad, t), jnp.bfloat16)     # B^T tile (varies)
            + 2 * _block_bytes((1, OC8, S_pad), jnp.bfloat16)  # Y^T (varies with n)
            + 1 * _block_bytes((OC8, C), jnp.bfloat16)       # wo_x^T (grid-invariant)
            + 2 * _block_bytes((1, OC8, t), out_dtype))      # out tile (varies)


def _fin_vmem(n_split, C, S_pad, I_pad, OC8):
    return (2 * _block_bytes((1, n_split, C, S_pad), jnp.float32)
            + _block_bytes((I_pad, C), jnp.bfloat16)
            + _block_bytes((I_pad, S_pad), jnp.float32)
            + _block_bytes((OC8, I_pad), jnp.bfloat16)
            + _block_bytes((OC8, S_pad), jnp.float32)
            + 2 * _block_bytes((1, OC8, S_pad), jnp.bfloat16))


def _pick_hw_tile(HW, C, S_pad, OC8, out_dtype, budget):
    cands = [d for d in range(HW, 0, -1) if HW % d == 0 and d % LANE == 0]
    if not cands:
        cands = [HW]
    for t in cands:
        if max(_pass1_vmem(t, C, S_pad),
               _pass2_vmem(t, C, S_pad, OC8, out_dtype)) <= budget:
            return t
    return cands[-1]


# ---------------------------------------------------------------------------
# Pass 1: stacked adaptive-avg-pool reduction over HW (channels-first)
#   pooled_part[n, s] (C, S_pad)  =  sum_k  x[n, :, tile(s,k)] @ A_T[tile(s,k), :]
# ---------------------------------------------------------------------------
def _pool_kernel(x_ref, at_ref, pooled_ref):
    @pl.when(pl.program_id(2) == 0)
    def _():
        pooled_ref[0, 0] = jnp.zeros(pooled_ref.shape[2:], pooled_ref.dtype)

    pooled_ref[0, 0] += jnp.dot(x_ref[0], at_ref[...],
                                preferred_element_type=jnp.float32)


# ---------------------------------------------------------------------------
# Pass 1b: branch 1x1 convs (+folded BN) + ReLU, projected into output-conv
#   channel space.  Stacked matmuls; relu + (-1e30 off-block bias) does the
#   per-branch masking.  co folded into column 0 (the 1x1 branch's all-ones
#   upsample column).  Output Y^T is bf16.
# ---------------------------------------------------------------------------
def _branch_kernel(pooled_ref, wcat_ref, bias_ref, wobr_ref, cofold_ref, y_ref):
    pooled = pooled_ref[0, 0]
    for s in range(1, pooled_ref.shape[1]):          # combine n_split partials
        pooled = pooled + pooled_ref[0, s]
    z = jnp.dot(wcat_ref[...], pooled.astype(jnp.bfloat16),
                preferred_element_type=jnp.float32)           # (I_pad, S_pad)
    z = jnp.maximum(z + bias_ref[...], 0.0).astype(jnp.bfloat16)
    y = jnp.dot(wobr_ref[...], z, preferred_element_type=jnp.float32)
    y_ref[0] = (y + cofold_ref[...]).astype(y_ref.dtype)      # (OC8, S_pad) bf16


# ---------------------------------------------------------------------------
# Pass 2: main HW-tiled pass (channels-first, lane-dense stores)
#   out^T_tile = relu(wo_x^T @ x_tile + Y^T @ B^T_tile)
# ---------------------------------------------------------------------------
def _main_kernel(x_ref, bt_ref, y_ref, woxt_ref, o_ref):
    acc = jnp.dot(woxt_ref[...], x_ref[0], preferred_element_type=jnp.float32)
    acc += jnp.dot(y_ref[0], bt_ref[...], preferred_element_type=jnp.float32)
    o_ref[0] = jnp.maximum(acc, 0.0).astype(o_ref.dtype)


# ---------------------------------------------------------------------------
# wrapper
# ---------------------------------------------------------------------------
def pyramid_pooling_forward(x_nchw, params, hw_tile=None, out_dtype=None):
    N, C, H, W = x_nchw.shape
    HW = H * W
    inter = params["w1"].shape[-1]
    OC = params["wo"].shape[-1]
    OC8 = _round_up(OC, SUBLANE)          # sublane-aligned output channels
    I_pad = _round_up(4 * inter, LANE)    # stacked branch-intermediate dim
    if out_dtype is None:
        out_dtype = x_nchw.dtype

    A_T_np, B_T_np, offsets, S_pad = build_stacked_mats_T(H, W)

    budget = _device_vmem_budget()
    if hw_tile is None:
        hw_tile = _pick_hw_tile(HW, C, S_pad, OC8, out_dtype, budget)
    assert HW % hw_tile == 0, (HW, hw_tile)
    assert hw_tile % LANE == 0 or hw_tile == HW, hw_tile
    n_hw = HW // hw_tile
    # split the HW reduction so v7x's second TensorCore has work even when N==1
    n_split = 2 if n_hw % 2 == 0 and n_hw >= 2 else 1
    n_hw_inner = n_hw // n_split

    # ---- operands (channels-first: just a reshape, no transpose) -----------
    x = x_nchw.reshape(N, C, HW).astype(jnp.bfloat16)
    A_bf = jnp.asarray(A_T_np, jnp.bfloat16)           # (HW, S_pad)
    B_bf = jnp.asarray(B_T_np, jnp.bfloat16)           # (S_pad, HW)

    # stacked branch weights / bias-mask (transposed layout)
    w_cat = jnp.concatenate([params[f"w{i}"] for i in range(1, 5)], axis=1)  # (C, 4*inter)
    wcat_T = (jnp.zeros((I_pad, C), jnp.float32)
              .at[:4 * inter, :].set(w_cat.T).astype(jnp.bfloat16))
    bias_T = jnp.full((I_pad, S_pad), NEG_BIG, jnp.float32)
    for b, (s, off) in enumerate(zip(POOL_SIZES, offsets)):
        c_b = params[f"c{b + 1}"].reshape(inter, 1)
        bias_T = bias_T.at[b * inter:(b + 1) * inter, off:off + s * s].set(
            jnp.broadcast_to(c_b, (inter, s * s)))

    wo = params["wo"]                                   # (2C, OC)
    co = params["co"].reshape(-1)                       # (OC,)
    wox_T = (jnp.zeros((OC8, C), jnp.float32)
             .at[:OC, :].set(wo[:C].T).astype(jnp.bfloat16))
    wobr_T = (jnp.zeros((OC8, I_pad), jnp.float32)
              .at[:OC, :4 * inter].set(wo[C:].T).astype(jnp.bfloat16))
    cofold = jnp.zeros((OC8, S_pad), jnp.float32).at[:OC, 0].set(co)

    # ---------------- pass 1: pooled reduction ------------------------------
    vmem1 = _vmem_limit(_pass1_vmem(hw_tile, C, S_pad), budget)
    pooled_part = pl.pallas_call(
        _pool_kernel,
        out_shape=jax.ShapeDtypeStruct((N, n_split, C, S_pad), jnp.float32),
        grid=(N, n_split, n_hw_inner),
        in_specs=[
            pl.BlockSpec((1, C, hw_tile),
                         lambda n, s, k: (n, 0, s * n_hw_inner + k)),
            pl.BlockSpec((hw_tile, S_pad),
                         lambda n, s, k: (s * n_hw_inner + k, 0)),
        ],
        out_specs=pl.BlockSpec((1, 1, C, S_pad), lambda n, s, k: (n, s, 0, 0)),
        compiler_params=pltpu.CompilerParams(
            dimension_semantics=("parallel", "parallel", "arbitrary"),
            vmem_limit_bytes=vmem1),
    )(x, A_bf)

    # ---------------- pass 1b: branch convs + projection (tiny) -------------
    vmem_fin = _vmem_limit(_fin_vmem(n_split, C, S_pad, I_pad, OC8), budget)
    y_all = pl.pallas_call(
        _branch_kernel,
        out_shape=jax.ShapeDtypeStruct((N, OC8, S_pad), jnp.bfloat16),
        grid=(N,),
        in_specs=[
            pl.BlockSpec((1, n_split, C, S_pad), lambda n: (n, 0, 0, 0)),
            pl.BlockSpec((I_pad, C), lambda n: (0, 0)),
            pl.BlockSpec((I_pad, S_pad), lambda n: (0, 0)),
            pl.BlockSpec((OC8, I_pad), lambda n: (0, 0)),
            pl.BlockSpec((OC8, S_pad), lambda n: (0, 0)),
        ],
        out_specs=pl.BlockSpec((1, OC8, S_pad), lambda n: (n, 0, 0)),
        compiler_params=pltpu.CompilerParams(
            dimension_semantics=("parallel",),
            vmem_limit_bytes=vmem_fin),
    )(pooled_part, wcat_T, bias_T, wobr_T, cofold)

    # ---------------- pass 2: main HW-tiled output pass ----------------------
    vmem2 = _vmem_limit(_pass2_vmem(hw_tile, C, S_pad, OC8, out_dtype), budget)
    out = pl.pallas_call(
        _main_kernel,
        out_shape=jax.ShapeDtypeStruct((N, OC8, HW), out_dtype),
        grid=(N, n_hw),
        in_specs=[
            pl.BlockSpec((1, C, hw_tile), lambda n, t: (n, 0, t)),
            pl.BlockSpec((S_pad, hw_tile), lambda n, t: (0, t)),
            pl.BlockSpec((1, OC8, S_pad), lambda n, t: (n, 0, 0)),
            pl.BlockSpec((OC8, C), lambda n, t: (0, 0)),
        ],
        out_specs=pl.BlockSpec((1, OC8, hw_tile), lambda n, t: (n, 0, t)),
        compiler_params=pltpu.CompilerParams(
            dimension_semantics=("parallel", "parallel"),
            vmem_limit_bytes=vmem2),
    )(x, B_bf, y_all, wox_T)

    # output is already NCHW-ordered (channels on the sublane axis): no transpose.
    if OC8 != OC:
        out = out[:, :OC, :]
    return out.reshape(N, OC, H, W)


# ---------------------------------------------------------------------------
# pure-JAX f32 reference (per-branch, concat-then-matmul — independent path)
# ---------------------------------------------------------------------------
def pyramid_pooling_reference(x_nchw, params):
    N, C, H, W = x_nchw.shape
    pool_mats, up_mats = build_branch_mats(H, W)
    x = jnp.transpose(x_nchw, (0, 2, 3, 1)).reshape(N, H * W, C)
    feats = [x]
    for i, (P, U) in enumerate(zip(pool_mats, up_mats), start=1):
        w, c = params[f"w{i}"], params[f"c{i}"]
        pooled = jnp.einsum("sh,nhc->nsc", jnp.asarray(P), x)
        y = jax.nn.relu(jnp.einsum("nsc,ci->nsi", pooled, w) + c)
        feats.append(jnp.einsum("hs,nsi->nhi", jnp.asarray(U), y))
    z = jnp.concatenate(feats, axis=-1)
    out = jax.nn.relu(jnp.einsum("nhk,ko->nho", z, params["wo"]) + params["co"])
    return out.reshape(N, H, W, -1).transpose(0, 3, 1, 2)


# ---------------------------------------------------------------------------
# deterministic params: 1x1 conv (no bias) with folded inference BatchNorm
# ---------------------------------------------------------------------------
def make_conv_bn_params(key, cin, cout):
    kw, kg, kb, km, kv = jax.random.split(key, 5)
    w = jax.random.normal(kw, (cin, cout), jnp.float32) * 0.1
    gamma = jax.random.uniform(kg, (cout,), jnp.float32, 0.5, 1.5)
    beta = jax.random.normal(kb, (cout,), jnp.float32) * 0.1
    mean = jax.random.normal(km, (cout,), jnp.float32) * 0.1
    var = jax.random.uniform(kv, (cout,), jnp.float32, 0.5, 1.5)
    scale = gamma / jnp.sqrt(var + BN_EPS)
    return w * scale[None, :], (beta - mean * scale)[None, :]


if __name__ == "__main__":
    N, C, H, W = 2, 8, 16, 16          # in_channels = 8
    OC = 8                             # out_channels
    inter = C // 4

    key = jax.random.PRNGKey(0)
    kx, k1, k2, k3, k4, ko = jax.random.split(key, 6)

    params = {}
    for i, kk in enumerate((k1, k2, k3, k4), start=1):
        params[f"w{i}"], params[f"c{i}"] = make_conv_bn_params(kk, C, inter)
    params["wo"], params["co"] = make_conv_bn_params(ko, 2 * C, OC)

    x = jax.random.normal(kx, (N, C, H, W), jnp.float32)

    # hw_tile=128 exercises the tiled / split-reduction path (2 HW tiles/image);
    # out_dtype=bf16 exercises the halved-writeback path from the perf review.
    out = jax.block_until_ready(
        pyramid_pooling_forward(x, params, hw_tile=128, out_dtype=jnp.bfloat16))
    ref = jax.block_until_ready(pyramid_pooling_reference(x, params))

    assert out.shape == (N, OC, H, W), out.shape
    out_np = np.asarray(out.astype(jnp.float32))
    ref_np = np.asarray(ref)
    err = float(np.max(np.abs(out_np - ref_np)))
    assert np.allclose(out_np, ref_np, atol=3e-2, rtol=3e-2), (
        f"kernel output mismatch vs reference, max abs err={err}")
    print("KERNEL_OK")
</pallas_src>

<mosaic_0001>
module attributes {stable_mosaic.version = 11 : i64} {
  func.func @_pool_kernel(%arg0: i32, %arg1: i32, %arg2: i32, %arg3: memref<1x8x128xbf16, #tpu.memory_space<vmem>>, %arg4: memref<128x128xbf16, #tpu.memory_space<vmem>>, %arg5: memref<1x1x8x128xf32, #tpu.memory_space<vmem>>) attributes {dimension_semantics = [#tpu.dimension_semantics<parallel>, #tpu.dimension_semantics<parallel>, #tpu.dimension_semantics<arbitrary>], iteration_bounds = array<i64: 2, 2, 1>, scalar_prefetch = 0 : i64, scratch_operands = 0 : i64, tpu.core_type = #tpu.core_type<tc>, window_params = [{transform_indices = @transform_0, window_bounds = array<i64: 1, 8, 128>}, {transform_indices = @transform_1, window_bounds = array<i64: 128, 128>}, {transform_indices = @transform_2, window_bounds = array<i64: 1, 1, 8, 128>}]} {
    %c0_i32 = arith.constant 0 : i32
    %0 = arith.cmpi eq, %arg2, %c0_i32 : i32
    %1 = arith.extui %0 : i1 to i32
    %c0_i32_0 = arith.constant 0 : i32
    %2 = arith.cmpi ne, %1, %c0_i32_0 : i32
    scf.if %2 {
      %cst_13 = arith.constant 0.000000e+00 : f32
      %13 = vector.broadcast %cst_13 : f32 to vector<8x128xf32>
      %c0_14 = arith.constant 0 : index
      %c0_15 = arith.constant 0 : index
      %c0_16 = arith.constant 0 : index
      %c0_17 = arith.constant 0 : index
      %14 = vector.load %arg5[%c0_14, %c0_15, %c0_16, %c0_17] : memref<1x1x8x128xf32, #tpu.memory_space<vmem>>, vector<1x1x8x128xf32>
      %15 = vector.shape_cast %14 : vector<1x1x8x128xf32> to vector<8x128xf32>
      %16 = vector.shape_cast %13 : vector<8x128xf32> to vector<1x1x8x128xf32>
      tpu.vector_store %arg5[%c0_14, %c0_15, %c0_16, %c0_17], %16 {strides = array<i32>} : memref<1x1x8x128xf32, #tpu.memory_space<vmem>>, vector<1x1x8x128xf32>,
    } else {
    }
    %c0 = arith.constant 0 : index
    %c0_1 = arith.constant 0 : index
    %c0_2 = arith.constant 0 : index
    %c0_3 = arith.constant 0 : index
    %3 = vector.load %arg5[%c0, %c0_1, %c0_2, %c0_3] : memref<1x1x8x128xf32, #tpu.memory_space<vmem>>, vector<1x1x8x128xf32>
    %4 = vector.shape_cast %3 : vector<1x1x8x128xf32> to vector<8x128xf32>
    %c0_4 = arith.constant 0 : index
    %c0_5 = arith.constant 0 : index
    %c0_6 = arith.constant 0 : index
    %5 = vector.load %arg3[%c0_4, %c0_5, %c0_6] : memref<1x8x128xbf16, #tpu.memory_space<vmem>>, vector<1x8x128xbf16>
    %6 = vector.shape_cast %5 : vector<1x8x128xbf16> to vector<8x128xbf16>
    %c0_7 = arith.constant 0 : index
    %c0_8 = arith.constant 0 : index
    %7 = vector.load %arg4[%c0_7, %c0_8] : memref<128x128xbf16, #tpu.memory_space<vmem>>, vector<128x128xbf16>
    %cst = arith.constant dense<0.000000e+00> : vector<8x128xf32>
    %8 = tpu.matmul %6, %7, %cst {dimension_numbers = #tpu.dot_dimension_numbers<[1], [0], [0], [1], [0, 0, 1, 1], [], []>} : vector<8x128xbf16>, vector<128x128xbf16>, vector<8x128xf32> -> vector<8x128xf32>
    %9 = arith.addf %4, %8 : vector<8x128xf32>
    %c0_9 = arith.constant 0 : index
    %c0_10 = arith.constant 0 : index
    %c0_11 = arith.constant 0 : index
    %c0_12 = arith.constant 0 : index
    %10 = vector.load %arg5[%c0_9, %c0_10, %c0_11, %c0_12] : memref<1x1x8x128xf32, #tpu.memory_space<vmem>>, vector<1x1x8x128xf32>
    %11 = vector.shape_cast %10 : vector<1x1x8x128xf32> to vector<8x128xf32>
    %12 = vector.shape_cast %9 : vector<8x128xf32> to vector<1x1x8x128xf32>
    tpu.vector_store %arg5[%c0_9, %c0_10, %c0_11, %c0_12], %12 {strides = array<i32>} : memref<1x1x8x128xf32, #tpu.memory_space<vmem>>, vector<1x1x8x128xf32>,
    return
  }
  func.func @transform_0(%arg0: i32, %arg1: i32, %arg2: i32) -> (i32, i32, i32) {
    %c1_i32 = arith.constant 1 : i32
    %0 = arith.muli %arg1, %c1_i32 : i32
    %1 = arith.addi %0, %arg2 : i32
    %c0_i32 = arith.constant 0 : i32
    %c0_i32_0 = arith.constant 0 : i32
    return %arg0, %c0_i32, %1 : i32, i32, i32
  }
  func.func @transform_1(%arg0: i32, %arg1: i32, %arg2: i32) -> (i32, i32) {
    %c1_i32 = arith.constant 1 : i32
    %0 = arith.muli %arg1, %c1_i32 : i32
    %1 = arith.addi %0, %arg2 : i32
    %c0_i32 = arith.constant 0 : i32
    %c0_i32_0 = arith.constant 0 : i32
    return %1, %c0_i32 : i32, i32
  }
  func.func @transform_2(%arg0: i32, %arg1: i32, %arg2: i32) -> (i32, i32, i32, i32) {
    %c0_i32 = arith.constant 0 : i32
    %c0_i32_0 = arith.constant 0 : i32
    %c0_i32_1 = arith.constant 0 : i32
    return %arg0, %arg1, %c0_i32, %c0_i32_0 : i32, i32, i32, i32
  }
}

</mosaic_0001>

<llo_original>
// kernel: tpu_custom_call.1
$region0: #{tpu_custom_call.1}
  #allocation0 [shape = 'u32[]', space=smem, size = 0x4, offset = 0x4, fixed_abs, tag = 'smem constant byte address 0x4 - core index']
  #allocation1 [shape = 'u32[144,128]{1,0:T(1,128)}', space=vmem, size = 0x12000, scoped, tag = 'internal scratch']
  %s0 = inlined_call_operand.hbm [shape: bf16[2,8,256], index: 0, kind: input, shape index: {}]
  %s1 = inlined_call_operand.hbm [shape: bf16[256,128], index: 1, kind: input, shape index: {}]
  %s2 = inlined_call_operand.hbm [shape: f32[2,2,8,128], index: 2, kind: output, shape index: {}]
  %s3 = sld [smem:[#allocation0]]
  $region53: #{tpu_custom_call.1} parent=0
    _
  %s5 = ssub.s32 1, %s3
  %s6 = scalar_select 0, %s5, %s3
  $region1: #{tpu_custom_call.1} parent=0
    #allocation2 [shape = 'u8[4096]{0}', space=vmem, size = 0x1000, scoped, tag = 'input window, operand 0']
    #allocation3 [shape = 's32[2]{0}', space=sflag, size = 0x8, scoped, tag = 'scoped memory for tpu_custom_call.1']
    #allocation4 [shape = 's32[2]{0}', space=sflag, size = 0x8, scoped, tag = 'scoped memory for tpu_custom_call.1']
    #allocation5 [shape = 'u8[65536]{0}', space=vmem, size = 0x10000, scoped, tag = 'input window, operand 1']
    #allocation6 [shape = 's32[2]{0}', space=sflag, size = 0x8, scoped, tag = 'scoped memory for tpu_custom_call.1']
    #allocation7 [shape = 'u8[8192]{0}', space=vmem, size = 0x2000, scoped, tag = 'output window, operand 0']
    %7 = vsyncpa [#allocation3], 0
    %s8 = scalar_lea.sflag [#allocation3], 1
    %9 = vsyncpa %s8, 0
    %10 = vsyncpa [#allocation6], 0
    %s11 = scalar_lea.sflag [#allocation6], 1
    %12 = vsyncpa %s11, 0
    %13 = vsyncpa [#allocation4], 0
    %s14 = scalar_lea.sflag [#allocation4], 1
    %15 = vsyncpa %s14, 0
    loop: start=0, step=1, limit=6
    $region2: #{tpu_custom_call.1} parent=1 // loop_pre_header
      _
    $region3: #{tpu_custom_call.1} parent=1 // loop_header
      %s17 = sphi 0, %s21
      %p18 = scmp.ge.s32.totalorder %s17, 6
      %s24 = sphi 0, %s43
      %s25 = sphi 0, %s39
      %s26 = sphi 0, %s35
      %s27 = sphi 0, %s24
      %s28 = sphi 0, %s25
      %s29 = sphi 0, %s26
      %s30 = sphi 0, %s27
      %s31 = sphi 0, %s28
      %s32 = sphi 0, %s29
      %s50 = sphi 0, %s52
      %s53 = sphi 0, %s50
      %s54 = sphi 0, %s53
      %s70 = sphi 0, %s54
      %s78 = sphi 0, %s80
      %s81 = sphi 0, %s78
      %s82 = sphi 0, %s81
      %s98 = sphi 0, %s82
      %s106 = sphi 0, %s108
      %s109 = sphi 0, %s106
      %s110 = sphi 0, %s109
      %s126 = sphi 0, %s110
    $region4: #{tpu_custom_call.1} parent=1 // loop_header_branch
      %20 = sbr.rel (%p18) target = $region8
    $region5: #{tpu_custom_call.1} parent=1 // loop_body
      %s22 = ssub.s32 %s17, 1
      %s23 = ssub.s32 %s17, 2
      %s33 = sadd.s32 1, %s26
      %p34 = scmp.ge.s32.totalorder %s33, 1
      %s35 = scalar_select %p34, 0, %s33
      %s36 = sadd.s32 1, %s25
      %s37 = scalar_select %p34, %s36, %s25
      %p38 = scmp.ge.s32.totalorder %s37, 2
      %s39 = scalar_select %p38, 0, %s37
      %s40 = sadd.s32 1, %s24
      %s41 = scalar_select %p38, %s40, %s24
      %p42 = scmp.ge.s32.totalorder %s41, 2
      %s43 = scalar_select %p42, 0, %s41
      %s44 = sadd.s32 %s25, %s26
      %s45 = sadd.s32 %s39, %s35
      %s46 = ssub.s32 %s24, %s43
      %s47 = ssub.s32 %s44, %s45
      %s48 = sor.u32 %s46, %s47
      %p49 = scmp.eq.s32.totalorder %s48, 0
      %s51 = sadd.s32 %s50, 1
      %s52 = scalar_select %p49, %s50, %s51
      %p55 = pneg %p49
      %p56 = scmp.eq.s32.totalorder %s17, 3
      %p57 = por %p55, %p56
      %p58 = scmp.ne.s32.totalorder %s50, %s53
      %p59 = scmp.eq.s32.totalorder %s17, 0
      %p60 = por %p58, %p59
      %p61 = scmp.ne.s32.totalorder %s50, %s53
      %p62 = scmp.eq.s32.totalorder %s22, 3
      %p63 = por %p61, %p62
      %p64 = scmp.ne.s32.totalorder %s53, %s54
      %p65 = scmp.eq.s32.totalorder %s22, 0
      %p66 = por %p64, %p65
      %p67 = scmp.ne.s32.totalorder %s53, %s54
      %p68 = scmp.eq.s32.totalorder %s23, 3
      %p69 = por %p67, %p68
      %p71 = scmp.ne.s32.totalorder %s54, %s70
      %p72 = scmp.eq.s32.totalorder %s23, 0
      %p73 = por %p71, %p72
      %s74 = sadd.s32 %s25, %s26
      %s75 = sadd.s32 %s39, %s35
      %s76 = ssub.s32 %s74, %s75
      %p77 = scmp.eq.s32.totalorder %s76, 0
      %s79 = sadd.s32 %s78, 1
      %s80 = scalar_select %p77, %s78, %s79
      %p83 = pneg %p77
      %p84 = scmp.eq.s32.totalorder %s17, 3
      %p85 = por %p83, %p84
      %p86 = scmp.ne.s32.totalorder %s78, %s81
      %p87 = scmp.eq.s32.totalorder %s17, 0
      %p88 = por %p86, %p87
      %p89 = scmp.ne.s32.totalorder %s78, %s81
      %p90 = scmp.eq.s32.totalorder %s22, 3
      %p91 = por %p89, %p90
      %p92 = scmp.ne.s32.totalorder %s81, %s82
      %p93 = scmp.eq.s32.totalorder %s22, 0
      %p94 = por %p92, %p93
      %p95 = scmp.ne.s32.totalorder %s81, %s82
      %p96 = scmp.eq.s32.totalorder %s23, 3
      %p97 = por %p95, %p96
      %p99 = scmp.ne.s32.totalorder %s82, %s98
      %p100 = scmp.eq.s32.totalorder %s23, 0
      %p101 = por %p99, %p100
      %s102 = ssub.s32 %s24, %s43
      %s103 = ssub.s32 %s25, %s39
      %s104 = sor.u32 %s102, %s103
      %p105 = scmp.eq.s32.totalorder %s104, 0
      %s107 = sadd.s32 %s106, 1
      %s108 = scalar_select %p105, %s106, %s107
      %p111 = pneg %p105
      %p112 = scmp.eq.s32.totalorder %s17, 3
      %p113 = por %p111, %p112
      %p114 = scmp.ne.s32.totalorder %s106, %s109
      %p115 = scmp.eq.s32.totalorder %s17, 0
      %p116 = por %p114, %p115
      %p117 = scmp.ne.s32.totalorder %s106, %s109
      %p118 = scmp.eq.s32.totalorder %s22, 3
      %p119 = por %p117, %p118
      %p120 = scmp.ne.s32.totalorder %s109, %s110
      %p121 = scmp.eq.s32.totalorder %s22, 0
      %p122 = por %p120, %p121
      %p123 = scmp.ne.s32.totalorder %s109, %s110
      %p124 = scmp.eq.s32.totalorder %s23, 3
      %p125 = por %p123, %p124
      %p127 = scmp.ne.s32.totalorder %s110, %s126
      %p128 = scmp.eq.s32.totalorder %s23, 0
      %p129 = por %p127, %p128
      %p130 = scmp.le.s32.totalorder 1, %s17
      %p131 = scmp.lt.s32.totalorder %s17, 5
      %p132 = pnand %p130, %p131
      %p133 = pneg %p132
      // Predicated region
      $region9: #{tpu_custom_call.1} parent=5 // pred_check
        _
      $region10: #{tpu_custom_call.1} parent=5 // pred_check_branch
        %135 = sbr.rel (%p132) target = $region12
      $region11: #{tpu_custom_call.1} parent=5 // pred_region
        %s136 = ssub.s32 %s17, 1
      $region12: #{tpu_custom_call.1} parent=5 // pred_fallthru
        _
      %p137 = scmp.lt.s32.totalorder %s17, 4
      // Predicated region
      $region13: #{tpu_custom_call.1} parent=5 // pred_check
        %p138 = pneg %p137
      $region14: #{tpu_custom_call.1} parent=5 // pred_check_branch
        %140 = sbr.rel (%p138) target = $region16
      $region15: #{tpu_custom_call.1} parent=5 // pred_region
        // Predicated region
        $region17: #{tpu_custom_call.1} parent=15 // pred_check
          %p141 = pneg %p60
        $region18: #{tpu_custom_call.1} parent=15 // pred_check_branch
          %143 = sbr.rel (%p141) target = $region20
        $region19: #{tpu_custom_call.1} parent=15 // pred_region
          %s144 = sand.u32 %s50, 1
          %s145 = scalar_lea.sflag [#allocation3], %s144
          %s146 = sand.u32 %s50, 1
          %s147 = smul.addr %s146, 4
          %s148 = scalar_lea.vmem [#allocation2], %s147
          %s149 = sadd.s32 %s25, %s26
          %s151 = ssub.s32 64, 64
          %152 = vsyncadd %s145, %s151
          %s153 = smul.addr %s24, 2
          %s154 = sadd.s32 %s149, %s153
          %s155 = smul.addr %s154, 64
          %s156 = scalar_lea.hbm %s0, %s155
          %s158 = sshll.u32 %s148, 4
          %s159 = int_to_ptr.vmem [resolvable:$true] %s158
          %161 = dma.hbm_to_vmem [thread:$0]  %s156, 64, %s159, %s145
        $region20: #{tpu_custom_call.1} parent=15 // pred_fallthru
          _
        // Predicated region
        $region21: #{tpu_custom_call.1} parent=15 // pred_check
          %p162 = pneg %p88
        $region22: #{tpu_custom_call.1} parent=15 // pred_check_branch
          %164 = sbr.rel (%p162) target = $region24
        $region23: #{tpu_custom_call.1} parent=15 // pred_region
          %s165 = sand.u32 %s78, 1
          %s166 = scalar_lea.sflag [#allocation6], %s165
          %s167 = sand.u32 %s78, 1
          %s168 = smul.addr %s167, 64
          %s169 = scalar_lea.vmem [#allocation5], %s168
          %s170 = sadd.s32 %s25, %s26
          %s171 = smul.u32 16, %s170
          %s173 = ssub.s32 1024, 1024
          %174 = vsyncadd %s166, %s173
          %s175 = smul.addr %s171, 64
          %s176 = scalar_lea.hbm %s1, %s175
          %s177 = sshll.u32 %s169, 4
          %s178 = int_to_ptr.vmem [resolvable:$true] %s177
          %183 = dma.hbm_to_vmem [thread:$0]  %s176, 1024, %s178, %s166, 64, 64, 4
        $region24: #{tpu_custom_call.1} parent=15 // pred_fallthru
          _
      $region16: #{tpu_custom_call.1} parent=5 // pred_fallthru
        _
      %p184 = scmp.le.s32.totalorder 1, %s17
      %p185 = scmp.lt.s32.totalorder %s17, 5
      %p186 = pnand %p184, %p185
      %p187 = pneg %p186
      // Predicated region
      $region25: #{tpu_custom_call.1} parent=5 // pred_check
        _
      $region26: #{tpu_custom_call.1} parent=5 // pred_check_branch
        %189 = sbr.rel (%p186) target = $region28
      $region27: #{tpu_custom_call.1} parent=5 // pred_region
        %s190 = ssub.s32 %s17, 1
        %s191 = sand.u32 %s53, 1
        %s192 = scalar_lea.sflag [#allocation3], %s191
        %s193 = sand.u32 %s53, 1
        %s194 = smul.addr %s193, 4
        %s195 = scalar_lea.vmem [#allocation2], %s194
        // Predicated region
        $region29: #{tpu_custom_call.1} parent=27 // pred_check
          %p196 = pneg %p66
        $region30: #{tpu_custom_call.1} parent=27 // pred_check_branch
          %198 = sbr.rel (%p196) target = $region32
        $region31: #{tpu_custom_call.1} parent=27 // pred_region
          %199 = dma.done %s192, 64
        $region32: #{tpu_custom_call.1} parent=27 // pred_fallthru
          _
        %s200 = sand.u32 %s81, 1
        %s201 = scalar_lea.sflag [#allocation6], %s200
        %s202 = sand.u32 %s81, 1
        %s203 = smul.addr %s202, 64
        %s204 = scalar_lea.vmem [#allocation5], %s203
        // Predicated region
        $region33: #{tpu_custom_call.1} parent=27 // pred_check
          %p205 = pneg %p94
        $region34: #{tpu_custom_call.1} parent=27 // pred_check_branch
          %207 = sbr.rel (%p205) target = $region36
        $region35: #{tpu_custom_call.1} parent=27 // pred_region
          %208 = dma.done %s201, 1024
        $region36: #{tpu_custom_call.1} parent=27 // pred_fallthru
          _
        %s209 = sand.u32 %s53, 1
        %s210 = scalar_lea.sflag [#allocation3], %s209
        %s211 = sand.u32 %s53, 1
        %s212 = smul.addr %s211, 4
        %s213 = scalar_lea.vmem [#allocation2], %s212
        %p214 = pneg %p66
        %p215 = pneg %p63
        %s216 = sand.u32 %s81, 1
        %s217 = scalar_lea.sflag [#allocation6], %s216
        %s218 = sand.u32 %s81, 1
        %s219 = smul.addr %s218, 64
        %s220 = scalar_lea.vmem [#allocation5], %s219
        %p221 = pneg %p94
        %p222 = pneg %p91
        %p223 = pneg %p122
        %p224 = pneg %p119
        %s225 = sand.u32 %s109, 1
        %s226 = scalar_lea.sflag [#allocation4], %s225
        %s227 = sand.u32 %s109, 1
        %s228 = smul.addr %s227, 8
        %s229 = scalar_lea.vmem [#allocation7], %s228
        %s230 = sadd.s32 %s28, %s29
        %s231 = sadd.s32 %s28, %s29
        %s232 = smul.u32 16, %s231
        %p234 = scmp.eq.s32.totalorder %s29, 0
        // Predicated region
        $region37: #{tpu_custom_call.1} parent=27 // pred_check
          %p235 = pneg %p234
        $region38: #{tpu_custom_call.1} parent=27 // pred_check_branch
          %237 = sbr.rel (%p235) target = $region40
        $region39: #{tpu_custom_call.1} parent=27 // pred_region
          %238 = vst [vmem:[%s229] sm:$0xff] 0.0
        $region40: #{tpu_custom_call.1} parent=27 // pred_fallthru
          _
        %v239 = vld [vmem:[%s229] sm:$0xff]
        %v240 = vld [vmem:[%s195] sm:$0xf]
        %v241 = vld [vmem:[%s204] sm:$0xf]
        %v242 = vld [vmem:[%s204 + $0x4] sm:$0xf]
        %v243 = vld [vmem:[%s204 + $0x8] sm:$0xf]
        %v244 = vld [vmem:[%s204 + $0xc] sm:$0xf]
        %v245 = vld [vmem:[%s204 + $0x10] sm:$0xf]
        %v246 = vld [vmem:[%s204 + $0x14] sm:$0xf]
        %v247 = vld [vmem:[%s204 + $0x18] sm:$0xf]
        %v248 = vld [vmem:[%s204 + $0x1c] sm:$0xf]
        %v249 = vld [vmem:[%s204 + $0x20] sm:$0xf]
        %v250 = vld [vmem:[%s204 + $0x24] sm:$0xf]
        %v251 = vld [vmem:[%s204 + $0x28] sm:$0xf]
        %v252 = vld [vmem:[%s204 + $0x2c] sm:$0xf]
        %v253 = vld [vmem:[%s204 + $0x30] sm:$0xf]
        %v254 = vld [vmem:[%s204 + $0x34] sm:$0xf]
        %v255 = vld [vmem:[%s204 + $0x38] sm:$0xf]
        %v256 = vld [vmem:[%s204 + $0x3c] sm:$0xf]
        %v273 = vunpack.c.l.b16 %v241
        %v274 = vunpack.c.l.b16 %v242
        %v275 = vunpack.c.l.b16 %v243
        %v276 = vunpack.c.l.b16 %v244
        %v277 = vunpack.c.l.b16 %v245
        %v278 = vunpack.c.l.b16 %v246
        %v279 = vunpack.c.l.b16 %v247
        %v280 = vunpack.c.l.b16 %v248
        %v281 = vunpack.c.l.b16 %v249
        %v282 = vunpack.c.l.b16 %v250
        %v283 = vunpack.c.l.b16 %v251
        %v284 = vunpack.c.l.b16 %v252
        %v285 = vunpack.c.l.b16 %v253
        %v286 = vunpack.c.l.b16 %v254
        %v287 = vunpack.c.l.b16 %v255
        %v288 = vunpack.c.l.b16 %v256
        %v289 = vpack.c.b16 %v274, %v273
        %v290 = vpack.c.b16 %v276, %v275
        %v291 = vpack.c.b16 %v278, %v277
        %v292 = vpack.c.b16 %v280, %v279
        %v293 = vpack.c.b16 %v282, %v281
        %v294 = vpack.c.b16 %v284, %v283
        %v295 = vpack.c.b16 %v286, %v285
        %v296 = vpack.c.b16 %v288, %v287
        %305 = vmatprep.subr.bf16.mxu0 0
        %306 = vmatpush1.bf16.msra.mxu0 %v289
        %307 = vmatprep.subr.bf16.mxu0 0
        %308 = vmatpush1.bf16.msra.mxu0 %v290
        %309 = vmatprep.subr.bf16.mxu0 0
        %310 = vmatpush1.bf16.msra.mxu0 %v291
        %311 = vmatprep.subr.bf16.mxu0 0
        %312 = vmatpush1.bf16.msra.mxu0 %v292
        %313 = vmatprep.subr.bf16.mxu0 0
        %314 = vmatpush1.bf16.msra.mxu0 %v293
        %315 = vmatprep.subr.bf16.mxu0 0
        %316 = vmatpush1.bf16.msra.mxu0 %v294
        %317 = vmatprep.subr.bf16.mxu0 0
        %318 = vmatpush1.bf16.msra.mxu0 %v295
        %319 = vmatprep.subr.bf16.mxu0 0
        %320 = vmatpush1.bf16.msra.mxu0 %v296
        %321 = vmatprep.subr.bf16.mxu0 0
        %322 = vmatpush1.bf16.msra.mxu0 0
        %323 = vmatprep.subr.bf16.mxu0 0
        %324 = vmatpush1.bf16.msra.mxu0 0
        %325 = vmatprep.subr.bf16.mxu0 0
        %326 = vmatpush1.bf16.msra.mxu0 0
        %327 = vmatprep.subr.bf16.mxu0 0
        %328 = vmatpush1.bf16.msra.mxu0 0
        %329 = vmatprep.subr.bf16.mxu0 0
        %330 = vmatpush1.bf16.msra.mxu0 0
        %331 = vmatprep.subr.bf16.mxu0 0
        %332 = vmatpush1.bf16.msra.mxu0 0
        %333 = vmatprep.subr.bf16.mxu0 0
        %334 = vmatpush1.bf16.msra.mxu0 0
        %335 = vmatprep.subr.bf16.mxu0 0
        %336 = vmatpush1.bf16.msra.mxu0 0
        %337 = vmatprep.mubr.bf16.mxu0 0
        %338 = vmatmul.mubr.bf16.gmra.mrb[0].mxu0 %v240
        %v339 = vpop.f32.mrb[0].mxu0
        %v340 = vadd.f32 0.0, %v339
        %v341 = vpop.f32.mrb[0].mxu0
        %v342 = vpop.f32.mrb[0].mxu0
        %v343 = vpop.f32.mrb[0].mxu0
        %344 = vdwg.mxu0
        %v345 = vadd.f32 %v239, %v340
        %346 = vst [vmem:[%s229] sm:$0xff] %v345
        %s347 = sand.u32 %s109, 1
        %s348 = scalar_lea.sflag [#allocation4], %s347
        %s349 = sand.u32 %s109, 1
        %s350 = smul.addr %s349, 8
        %s351 = scalar_lea.vmem [#allocation7], %s350
        // Predicated region
        $region41: #{tpu_custom_call.1} parent=27 // pred_check
          %p352 = pneg %p119
        $region42: #{tpu_custom_call.1} parent=27 // pred_check_branch
          %354 = sbr.rel (%p352) target = $region44
        $region43: #{tpu_custom_call.1} parent=27 // pred_region
          %s356 = ssub.s32 128, 128
          %357 = vsyncadd %s348, %s356
          %s358 = smul.addr %s27, 2
          %s359 = sadd.s32 %s28, %s358
          %s360 = smul.addr %s359, 128
          %s361 = scalar_lea.hbm %s2, %s360
          %s363 = sshll.u32 %s351, 4
          %s364 = int_to_ptr.vmem [resolvable:$true] %s363
          %366 = dma.vmem_to_hbm [thread:$0]  %s364, 128, %s361, %s348
        $region44: #{tpu_custom_call.1} parent=27 // pred_fallthru
          _
      $region28: #{tpu_custom_call.1} parent=5 // pred_fallthru
        _
      %p367 = scmp.le.s32.totalorder 2, %s17
      // Predicated region
      $region45: #{tpu_custom_call.1} parent=5 // pred_check
        %p368 = pneg %p367
      $region46: #{tpu_custom_call.1} parent=5 // pred_check_branch
        %370 = sbr.rel (%p368) target = $region48
      $region47: #{tpu_custom_call.1} parent=5 // pred_region
        %s371 = ssub.s32 %s17, 2
        // Predicated region
        $region49: #{tpu_custom_call.1} parent=47 // pred_check
          %p372 = pneg %p125
        $region50: #{tpu_custom_call.1} parent=47 // pred_check_branch
          %374 = sbr.rel (%p372) target = $region52
        $region51: #{tpu_custom_call.1} parent=47 // pred_region
          %s375 = sand.u32 %s110, 1
          %s376 = scalar_lea.sflag [#allocation4], %s375
          %s377 = sand.u32 %s110, 1
          %s378 = smul.addr %s377, 8
          %s379 = scalar_lea.vmem [#allocation7], %s378
          %380 = dma.done %s376, 128
        $region52: #{tpu_custom_call.1} parent=47 // pred_fallthru
          _
      $region48: #{tpu_custom_call.1} parent=5 // pred_fallthru
        _
    $region6: #{tpu_custom_call.1} parent=1 // loop_footer
      %s21 = sadd.s32 1, %s17
    $region7: #{tpu_custom_call.1} parent=1 // loop_footer_branch
      %16 = sbr.rel target = $region3
    $region8: #{tpu_custom_call.1} parent=1 // loop_exit
      _
    %381 = vsyncpa [#allocation3], 1
    %s382 = scalar_lea.sflag [#allocation3], 1
    %383 = vsyncpa %s382, 1
    %384 = vsyncpa [#allocation6], 1
    %s385 = scalar_lea.sflag [#allocation6], 1
    %386 = vsyncpa %s385, 1
    %387 = vsyncpa [#allocation4], 1
    %s388 = scalar_lea.sflag [#allocation4], 1
    %389 = vsyncpa %s388, 1

</llo_original>
